<compile_context>
chip_gen: v7x
topology: tpu7x:2x2x1
jax: 0.10.0
libtpu: 0.0.40
codegen_flags: <defaults>
</compile_context>

<pallas_src>
import functools

import jax
import jax.numpy as jnp
from jax.experimental import pallas as pl
from jax.experimental.pallas import tpu as pltpu

_EPS = 1e-12           # F.normalize default eps
_EPS_SQ = _EPS * _EPS  # clamping the squared norm == clamping the norm (sqrt is monotone)


def _round_up(x, m):
    return ((x + m - 1) // m) * m


def cos_cell_kernel(x_ref, wt_ref, out_ref, xn_ref, *, s):
    """One (tm x tn) tile of  s * row_normalize(x) @ col_normalize(w_t)."""
    j = pl.program_id(1)

    # Row-normalize the input block once per batch tile.  The output-tile axis
    # is "arbitrary" (sequential, innermost), so the scratch persists across j.
    @pl.when(j == 0)
    def _():
        x = x_ref[...]
        inv_norm = jax.lax.rsqrt(
            jnp.maximum(jnp.sum(x * x, axis=1, keepdims=True), _EPS_SQ))
        xn_ref[...] = x * inv_norm

    # Column-normalize this tile of the transposed weight (== rows of the
    # original PyTorch (out, in) weight) and do one MXU matmul, f32 accum.
    w = wt_ref[...]
    w_inv = jax.lax.rsqrt(
        jnp.maximum(jnp.sum(w * w, axis=0, keepdims=True), _EPS_SQ))
    cos = jnp.dot(xn_ref[...], w * w_inv, preferred_element_type=jnp.float32)
    out_ref[...] = (s * cos).astype(out_ref.dtype)


def cos_cell_forward(x, weight, s=30.0, *, tm=128, tn=512):
    """x: (B, in_features) f32; weight: (out_features, in_features) f32 (PyTorch layout)."""
    B, K = x.shape
    N, K2 = weight.shape
    assert K == K2, (K, K2)
    w_t = weight.T  # (in_features, out_features): lane-dense matmul RHS

    tm = min(tm, _round_up(B, 8))      # multiple of 8 (sublane)
    tn = min(tn, _round_up(N, 128))    # multiple of 128 (lane)
    Bp = _round_up(B, tm)
    Np = _round_up(N, tn)
    if Bp != B:
        x = jnp.pad(x, ((0, Bp - B), (0, 0)))        # zero rows -> zero output rows
    if Np != N:
        w_t = jnp.pad(w_t, ((0, 0), (0, Np - N)))    # zero cols -> zero output cols

    grid = (Bp // tm, Np // tn)
    kernel = functools.partial(cos_cell_kernel, s=float(s))

    flops = 2 * Bp * K * Np + 3 * Bp * K + 3 * K * Np
    bytes_accessed = 4 * (Bp * K + K * Np + Bp * Np)

    out = pl.pallas_call(
        kernel,
        out_shape=jax.ShapeDtypeStruct((Bp, Np), jnp.float32),
        grid_spec=pltpu.PrefetchScalarGridSpec(
            num_scalar_prefetch=0,
            grid=grid,
            in_specs=[
                pl.BlockSpec((tm, K), lambda i, j: (i, 0)),   # x: same block for all j
                pl.BlockSpec((K, tn), lambda i, j: (0, j)),   # weight tile per output tile
            ],
            out_specs=pl.BlockSpec((tm, tn), lambda i, j: (i, j)),
            scratch_shapes=[pltpu.VMEM((tm, K), jnp.float32)],  # cached normalized x
        ),
        compiler_params=pltpu.CompilerParams(
            # batch tiles are independent -> megacore-parallel on v7x; output
            # axis kept sequential so the normalized-x scratch is reused.
            dimension_semantics=("parallel", "arbitrary"),
            vmem_limit_bytes=32 * 1024 * 1024,
        ),
        cost_estimate=pl.CostEstimate(
            flops=flops, transcendentals=Bp + Np, bytes_accessed=bytes_accessed),
    )(x, w_t)

    return out[:B, :N]


def cos_cell_reference(x, weight, s=30.0):
    """Pure-JAX reference of the PyTorch forward."""
    xn = x * jax.lax.rsqrt(
        jnp.maximum(jnp.sum(x * x, axis=1, keepdims=True), _EPS_SQ))
    wn = weight * jax.lax.rsqrt(
        jnp.maximum(jnp.sum(weight * weight, axis=1, keepdims=True), _EPS_SQ))
    return s * jnp.dot(xn, wn.T, precision=jax.lax.Precision.HIGHEST)


if __name__ == "__main__":
    # Small but MXU-meaningful shapes: batch=256 (>=128 per the perf review),
    # in_features=64, out_features=1024 -> grid (2, 2) with tm=128, tn=512.
    B, in_features, out_features, s = 256, 64, 1024, 30.0

    key = jax.random.PRNGKey(0)
    kx, kw = jax.random.split(key)
    x = jax.random.normal(kx, (B, in_features), jnp.float32)
    # nn.init.xavier_uniform_ on a (out_features, in_features) parameter.
    bound = (6.0 / (in_features + out_features)) ** 0.5
    weight = jax.random.uniform(kw, (out_features, in_features), jnp.float32,
                                -bound, bound)

    out = cos_cell_forward(x, weight, s)
    jax.block_until_ready(out)

    ref = cos_cell_reference(x, weight, s)
    assert out.shape == (B, out_features)
    assert jnp.allclose(out, ref, atol=1e-3, rtol=1e-3), \
        float(jnp.max(jnp.abs(out - ref)))

    print("KERNEL_OK")
</pallas_src>

<mosaic_0001>
module attributes {stable_mosaic.version = 11 : i64} {
  func.func @cos_cell_kernel(%arg0: i32, %arg1: i32, %arg2: memref<128x64xf32, #tpu.memory_space<vmem>>, %arg3: memref<64x512xf32, #tpu.memory_space<vmem>>, %arg4: memref<128x512xf32, #tpu.memory_space<vmem>>, %arg5: memref<128x64xf32, #tpu.memory_space<vmem>>) attributes {dimension_semantics = [#tpu.dimension_semantics<parallel>, #tpu.dimension_semantics<arbitrary>], iteration_bounds = array<i64: 2, 2>, scalar_prefetch = 0 : i64, scratch_operands = 1 : i64, tpu.core_type = #tpu.core_type<tc>, window_params = [{transform_indices = @transform_0, window_bounds = array<i64: 128, 64>}, {transform_indices = @transform_1, window_bounds = array<i64: 64, 512>}, {transform_indices = @transform_2, window_bounds = array<i64: 128, 512>}]} {
    %c0_i32 = arith.constant 0 : i32
    %0 = arith.cmpi eq, %arg1, %c0_i32 : i32
    %1 = arith.extui %0 : i1 to i32
    %c0_i32_0 = arith.constant 0 : i32
    %2 = arith.cmpi ne, %1, %c0_i32_0 : i32
    scf.if %2 {
      %c0_9 = arith.constant 0 : index
      %c0_10 = arith.constant 0 : index
      %17 = vector.load %arg2[%c0_9, %c0_10] : memref<128x64xf32, #tpu.memory_space<vmem>>, vector<128x64xf32>
      %18 = arith.mulf %17, %17 : vector<128x64xf32>
      %cst_11 = arith.constant dense<0.000000e+00> : vector<128xf32>
      %19 = vector.multi_reduction <add>, %18, %cst_11 [1] : vector<128x64xf32> to vector<128xf32>
      %20 = vector.shape_cast %19 : vector<128xf32> to vector<128x1xf32>
      %cst_12 = arith.constant 1.000000e-24 : f32
      %21 = vector.broadcast %cst_12 : f32 to vector<128x1xf32>
      %22 = arith.maximumf %20, %21 : vector<128x1xf32>
      %23 = math.rsqrt %22 : vector<128x1xf32>
      %24 = vector.broadcast %23 : vector<128x1xf32> to vector<128x64xf32>
      %25 = arith.mulf %17, %24 : vector<128x64xf32>
      %c0_13 = arith.constant 0 : index
      %c0_14 = arith.constant 0 : index
      %26 = vector.load %arg5[%c0_13, %c0_14] : memref<128x64xf32, #tpu.memory_space<vmem>>, vector<128x64xf32>
      tpu.vector_store %arg5[%c0_13, %c0_14], %25 {strides = array<i32>} : memref<128x64xf32, #tpu.memory_space<vmem>>, vector<128x64xf32>,
    } else {
    }
    %c0 = arith.constant 0 : index
    %c0_1 = arith.constant 0 : index
    %3 = vector.load %arg3[%c0, %c0_1] : memref<64x512xf32, #tpu.memory_space<vmem>>, vector<64x512xf32>
    %4 = arith.mulf %3, %3 : vector<64x512xf32>
    %cst = arith.constant dense<0.000000e+00> : vector<512xf32>
    %5 = vector.multi_reduction <add>, %4, %cst [0] : vector<64x512xf32> to vector<512xf32>
    %6 = vector.shape_cast %5 : vector<512xf32> to vector<1x512xf32>
    %cst_2 = arith.constant 1.000000e-24 : f32
    %7 = vector.broadcast %cst_2 : f32 to vector<1x512xf32>
    %8 = arith.maximumf %6, %7 : vector<1x512xf32>
    %9 = math.rsqrt %8 : vector<1x512xf32>
    %c0_3 = arith.constant 0 : index
    %c0_4 = arith.constant 0 : index
    %10 = vector.load %arg5[%c0_3, %c0_4] : memref<128x64xf32, #tpu.memory_space<vmem>>, vector<128x64xf32>
    %11 = vector.broadcast %9 : vector<1x512xf32> to vector<64x512xf32>
    %12 = arith.mulf %3, %11 : vector<64x512xf32>
    %cst_5 = arith.constant dense<0.000000e+00> : vector<128x512xf32>
    %13 = tpu.matmul %10, %12, %cst_5 {dimension_numbers = #tpu.dot_dimension_numbers<[1], [0], [0], [1], [0, 0, 1, 1], [], []>} : vector<128x64xf32>, vector<64x512xf32>, vector<128x512xf32> -> vector<128x512xf32>
    %cst_6 = arith.constant 3.000000e+01 : f32
    %14 = vector.broadcast %cst_6 : f32 to vector<128x512xf32>
    %15 = arith.mulf %14, %13 : vector<128x512xf32>
    %c0_7 = arith.constant 0 : index
    %c0_8 = arith.constant 0 : index
    %16 = vector.load %arg4[%c0_7, %c0_8] : memref<128x512xf32, #tpu.memory_space<vmem>>, vector<128x512xf32>
    tpu.vector_store %arg4[%c0_7, %c0_8], %15 {strides = array<i32>} : memref<128x512xf32, #tpu.memory_space<vmem>>, vector<128x512xf32>,
    return
  }
  func.func @transform_0(%arg0: i32, %arg1: i32) -> (i32, i32) {
    %c0_i32 = arith.constant 0 : i32
    %c0_i32_0 = arith.constant 0 : i32
    return %arg0, %c0_i32 : i32, i32
  }
  func.func @transform_1(%arg0: i32, %arg1: i32) -> (i32, i32) {
    %c0_i32 = arith.constant 0 : i32
    %c0_i32_0 = arith.constant 0 : i32
    return %c0_i32, %arg1 : i32, i32
  }
  func.func @transform_2(%arg0: i32, %arg1: i32) -> (i32, i32) {
    %c0_i32 = arith.constant 0 : i32
    return %arg0, %arg1 : i32, i32
  }
}

</mosaic_0001>

<llo_original>
// kernel: tpu_custom_call.1
$region0: #{tpu_custom_call.1}
  #allocation0 [shape = 'u32[]', space=smem, size = 0x4, offset = 0x4, fixed_abs, tag = 'smem constant byte address 0x4 - core index']
  #allocation1 [shape = 'u32[144,128]{1,0:T(1,128)}', space=vmem, size = 0x12000, scoped, tag = 'internal scratch']
  #allocation2 [shape = 'f32[128,64]{1,0:T(8,128)}', space=vmem, size = 0x10000, scoped, tag = 'scratch operand']
  %s0 = inlined_call_operand.vmem [shape: f32[256,64], index: 0, kind: input, shape index: {}]
  %s1 = inlined_call_operand.hbm [shape: f32[64,1024], index: 1, kind: input, shape index: {}]
  %s2 = inlined_call_operand.hbm [shape: f32[256,1024], index: 2, kind: output, shape index: {}]
  %s3 = sld [smem:[#allocation0]]
  $region49: #{tpu_custom_call.1} parent=0
    _
  %s5 = ssub.s32 1, %s3
  %s6 = scalar_select 0, %s5, %s3
  $region1: #{tpu_custom_call.1} parent=0
    #allocation3 [shape = 'u8[262144]{0}', space=vmem, size = 0x40000, scoped, tag = 'input window, operand 1']
    #allocation4 [shape = 's32[2]{0}', space=sflag, size = 0x8, scoped, tag = 'scoped memory for tpu_custom_call.1']
    #allocation5 [shape = 's32[2]{0}', space=sflag, size = 0x8, scoped, tag = 'scoped memory for tpu_custom_call.1']
    #allocation6 [shape = 'u8[524288]{0}', space=vmem, size = 0x80000, scoped, tag = 'output window, operand 0']
    %7 = vsyncpa [#allocation4], 0
    %s8 = scalar_lea.sflag [#allocation4], 1
    %9 = vsyncpa %s8, 0
    %10 = vsyncpa [#allocation5], 0
    %s11 = scalar_lea.sflag [#allocation5], 1
    %12 = vsyncpa %s11, 0
    loop: start=0, step=1, limit=6
    $region2: #{tpu_custom_call.1} parent=1 // loop_pre_header
      _
    $region3: #{tpu_custom_call.1} parent=1 // loop_header
      %s14 = sphi 0, %s18
      %p15 = scmp.ge.s32.totalorder %s14, 6
      %s21 = sphi 0, %s33
      %s22 = sphi 0, %s29
      %s23 = sphi 0, %s21
      %s24 = sphi 0, %s22
      %s25 = sphi 0, %s23
      %s26 = sphi 0, %s24
      %s36 = sphi 0, %s38
      %s39 = sphi 0, %s36
      %s40 = sphi 0, %s39
      %s56 = sphi 0, %s40
      %s62 = sphi 0, %s64
      %s65 = sphi 0, %s62
      %s66 = sphi 0, %s65
      %s82 = sphi 0, %s66
      %s90 = sphi 0, %s92
      %s93 = sphi 0, %s90
      %s94 = sphi 0, %s93
      %s110 = sphi 0, %s94
    $region4: #{tpu_custom_call.1} parent=1 // loop_header_branch
      %17 = sbr.rel (%p15) target = $region8
    $region5: #{tpu_custom_call.1} parent=1 // loop_body
      %s19 = ssub.s32 %s14, 1
      %s20 = ssub.s32 %s14, 2
      %s27 = sadd.s32 1, %s22
      %p28 = scmp.ge.s32.totalorder %s27, 2
      %s29 = scalar_select %p28, 0, %s27
      %s30 = sadd.s32 1, %s21
      %s31 = scalar_select %p28, %s30, %s21
      %p32 = scmp.ge.s32.totalorder %s31, 2
      %s33 = scalar_select %p32, 0, %s31
      %s34 = ssub.s32 %s21, %s33
      %p35 = scmp.eq.s32.totalorder %s34, 0
      %s37 = sadd.s32 %s36, 1
      %s38 = scalar_select %p35, %s36, %s37
      %p41 = pneg %p35
      %p42 = scmp.eq.s32.totalorder %s14, 3
      %p43 = por %p41, %p42
      %p44 = scmp.ne.s32.totalorder %s36, %s39
      %p45 = scmp.eq.s32.totalorder %s14, 0
      %p46 = por %p44, %p45
      %p47 = scmp.ne.s32.totalorder %s36, %s39
      %p48 = scmp.eq.s32.totalorder %s19, 3
      %p49 = por %p47, %p48
      %p50 = scmp.ne.s32.totalorder %s39, %s40
      %p51 = scmp.eq.s32.totalorder %s19, 0
      %p52 = por %p50, %p51
      %p53 = scmp.ne.s32.totalorder %s39, %s40
      %p54 = scmp.eq.s32.totalorder %s20, 3
      %p55 = por %p53, %p54
      %p57 = scmp.ne.s32.totalorder %s40, %s56
      %p58 = scmp.eq.s32.totalorder %s20, 0
      %p59 = por %p57, %p58
      %s60 = ssub.s32 %s22, %s29
      %p61 = scmp.eq.s32.totalorder %s60, 0
      %s63 = sadd.s32 %s62, 1
      %s64 = scalar_select %p61, %s62, %s63
      %p67 = pneg %p61
      %p68 = scmp.eq.s32.totalorder %s14, 3
      %p69 = por %p67, %p68
      %p70 = scmp.ne.s32.totalorder %s62, %s65
      %p71 = scmp.eq.s32.totalorder %s14, 0
      %p72 = por %p70, %p71
      %p73 = scmp.ne.s32.totalorder %s62, %s65
      %p74 = scmp.eq.s32.totalorder %s19, 3
      %p75 = por %p73, %p74
      %p76 = scmp.ne.s32.totalorder %s65, %s66
      %p77 = scmp.eq.s32.totalorder %s19, 0
      %p78 = por %p76, %p77
      %p79 = scmp.ne.s32.totalorder %s65, %s66
      %p80 = scmp.eq.s32.totalorder %s20, 3
      %p81 = por %p79, %p80
      %p83 = scmp.ne.s32.totalorder %s66, %s82
      %p84 = scmp.eq.s32.totalorder %s20, 0
      %p85 = por %p83, %p84
      %s86 = ssub.s32 %s21, %s33
      %s87 = ssub.s32 %s22, %s29
      %s88 = sor.u32 %s86, %s87
      %p89 = scmp.eq.s32.totalorder %s88, 0
      %s91 = sadd.s32 %s90, 1
      %s92 = scalar_select %p89, %s90, %s91
      %p95 = pneg %p89
      %p96 = scmp.eq.s32.totalorder %s14, 3
      %p97 = por %p95, %p96
      %p98 = scmp.ne.s32.totalorder %s90, %s93
      %p99 = scmp.eq.s32.totalorder %s14, 0
      %p100 = por %p98, %p99
      %p101 = scmp.ne.s32.totalorder %s90, %s93
      %p102 = scmp.eq.s32.totalorder %s19, 3
      %p103 = por %p101, %p102
      %p104 = scmp.ne.s32.totalorder %s93, %s94
      %p105 = scmp.eq.s32.totalorder %s19, 0
      %p106 = por %p104, %p105
      %p107 = scmp.ne.s32.totalorder %s93, %s94
      %p108 = scmp.eq.s32.totalorder %s20, 3
      %p109 = por %p107, %p108
      %p111 = scmp.ne.s32.totalorder %s94, %s110
      %p112 = scmp.eq.s32.totalorder %s20, 0
      %p113 = por %p111, %p112
      %p114 = scmp.le.s32.totalorder 1, %s14
      %p115 = scmp.lt.s32.totalorder %s14, 5
      %p116 = pnand %p114, %p115
      %p117 = pneg %p116
      // Predicated region
      $region9: #{tpu_custom_call.1} parent=5 // pred_check
        _
      $region10: #{tpu_custom_call.1} parent=5 // pred_check_branch
        %119 = sbr.rel (%p116) target = $region12
      $region11: #{tpu_custom_call.1} parent=5 // pred_region
        %s120 = ssub.s32 %s14, 1
      $region12: #{tpu_custom_call.1} parent=5 // pred_fallthru
        _
      %p121 = scmp.lt.s32.totalorder %s14, 4
      // Predicated region
      $region13: #{tpu_custom_call.1} parent=5 // pred_check
        %p122 = pneg %p121
      $region14: #{tpu_custom_call.1} parent=5 // pred_check_branch
        %124 = sbr.rel (%p122) target = $region16
      $region15: #{tpu_custom_call.1} parent=5 // pred_region
        // Predicated region
        $region17: #{tpu_custom_call.1} parent=15 // pred_check
          %p125 = pneg %p46
        $region18: #{tpu_custom_call.1} parent=15 // pred_check_branch
          %127 = sbr.rel (%p125) target = $region20
        $region19: #{tpu_custom_call.1} parent=15 // pred_region
          %s128 = smul.u32 16, %s21
          %p129 = scmp.lt.s32.totalorder %s128, 31
          %s130 = scalar_select %p129, %s128, 31
          %s131 = smul.addr %s130, 8
          %s132 = scalar_lea.vmem %s0, %s131
          %s133 = smul.u32 16, %s21
        $region20: #{tpu_custom_call.1} parent=15 // pred_fallthru
          _
        // Predicated region
        $region21: #{tpu_custom_call.1} parent=15 // pred_check
          %p134 = pneg %p72
        $region22: #{tpu_custom_call.1} parent=15 // pred_check_branch
          %136 = sbr.rel (%p134) target = $region24
        $region23: #{tpu_custom_call.1} parent=15 // pred_region
          %s137 = sand.u32 %s62, 1
          %s138 = scalar_lea.sflag [#allocation4], %s137
          %s139 = sand.u32 %s62, 1
          %s140 = smul.addr %s139, 256
          %s141 = scalar_lea.vmem [#allocation3], %s140
          %s142 = smul.u32 4, %s22
          %s144 = ssub.s32 4096, 4096
          %145 = vsyncadd %s138, %s144
          %s146 = smul.addr %s142, 128
          %s147 = scalar_lea.hbm %s1, %s146
          %s148 = sshll.u32 %s141, 4
          %s149 = int_to_ptr.vmem [resolvable:$true] %s148
          %154 = dma.hbm_to_vmem [thread:$0]  %s147, 4096, %s149, %s138, 1024, 512, 32
        $region24: #{tpu_custom_call.1} parent=15 // pred_fallthru
          _
      $region16: #{tpu_custom_call.1} parent=5 // pred_fallthru
        _
      %p155 = scmp.le.s32.totalorder 1, %s14
      %p156 = scmp.lt.s32.totalorder %s14, 5
      %p157 = pnand %p155, %p156
      %p158 = pneg %p157
      // Predicated region
      $region25: #{tpu_custom_call.1} parent=5 // pred_check
        _
      $region26: #{tpu_custom_call.1} parent=5 // pred_check_branch
        %160 = sbr.rel (%p157) target = $region28
      $region27: #{tpu_custom_call.1} parent=5 // pred_region
        %s161 = ssub.s32 %s14, 1
        %s162 = sand.u32 %s65, 1
        %s163 = scalar_lea.sflag [#allocation4], %s162
        %s164 = sand.u32 %s65, 1
        %s165 = smul.addr %s164, 256
        %s166 = scalar_lea.vmem [#allocation3], %s165
        // Predicated region
        $region29: #{tpu_custom_call.1} parent=27 // pred_check
          %p167 = pneg %p78
        $region30: #{tpu_custom_call.1} parent=27 // pred_check_branch
          %169 = sbr.rel (%p167) target = $region32
        $region31: #{tpu_custom_call.1} parent=27 // pred_region
          %170 = dma.done %s163, 4096
        $region32: #{tpu_custom_call.1} parent=27 // pred_fallthru
          _
        %s171 = smul.u32 16, %s23
        %p172 = scmp.lt.s32.totalorder %s171, 31
        %s173 = scalar_select %p172, %s171, 31
        %s174 = smul.addr %s173, 8
        %s175 = scalar_lea.vmem %s0, %s174
        %p176 = pneg %p52
        %p177 = pneg %p49
        %s178 = sand.u32 %s65, 1
        %s179 = scalar_lea.sflag [#allocation4], %s178
        %s180 = sand.u32 %s65, 1
        %s181 = smul.addr %s180, 256
        %s182 = scalar_lea.vmem [#allocation3], %s181
        %p183 = pneg %p78
        %p184 = pneg %p75
        %p185 = pneg %p106
        %p186 = pneg %p103
        %s187 = sand.u32 %s93, 1
        %s188 = scalar_lea.sflag [#allocation5], %s187
        %s189 = sand.u32 %s93, 1
        %s190 = smul.addr %s189, 512
        %s191 = scalar_lea.vmem [#allocation6], %s190
        %s192 = smul.u32 16, %s23
        %p193 = scmp.lt.s32.totalorder %s192, 31
        %s194 = scalar_select %p193, %s192, 31
        %s195 = smul.addr %s194, 8
        %s196 = scalar_lea.vmem %s0, %s195
        %s197 = smul.u32 16, %s23
        %s198 = smul.u32 4, %s24
        %s199 = smul.u32 16, %s23
        %s200 = smul.u32 4, %s24
        %p201 = scmp.eq.s32.totalorder %s24, 0
        // Predicated region
        $region33: #{tpu_custom_call.1} parent=27 // pred_check
          %p202 = pneg %p201
        $region34: #{tpu_custom_call.1} parent=27 // pred_check_branch
          %204 = sbr.rel (%p202) target = $region36
        $region35: #{tpu_custom_call.1} parent=27 // pred_region
          %v205 = vld [vmem:[%s196] sm:$0xff]
          %v206 = vld [vmem:[%s196 + $0x8] sm:$0xff]
          %v207 = vld [vmem:[%s196 + $0x10] sm:$0xff]
          %v208 = vld [vmem:[%s196 + $0x18] sm:$0xff]
          %v209 = vld [vmem:[%s196 + $0x20] sm:$0xff]
          %v210 = vld [vmem:[%s196 + $0x28] sm:$0xff]
          %v211 = vld [vmem:[%s196 + $0x30] sm:$0xff]
          %v212 = vld [vmem:[%s196 + $0x38] sm:$0xff]
          %v213 = vld [vmem:[%s196 + $0x40] sm:$0xff]
          %v214 = vld [vmem:[%s196 + $0x48] sm:$0xff]
          %v215 = vld [vmem:[%s196 + $0x50] sm:$0xff]
          %v216 = vld [vmem:[%s196 + $0x58] sm:$0xff]
          %v217 = vld [vmem:[%s196 + $0x60] sm:$0xff]
          %v218 = vld [vmem:[%s196 + $0x68] sm:$0xff]
          %v219 = vld [vmem:[%s196 + $0x70] sm:$0xff]
          %v220 = vld [vmem:[%s196 + $0x78] sm:$0xff]
          %v221 = vmul.f32 %v205, %v205
          %v222 = vmul.f32 %v206, %v206
          %v223 = vmul.f32 %v207, %v207
          %v224 = vmul.f32 %v208, %v208
          %v225 = vmul.f32 %v209, %v209
          %v226 = vmul.f32 %v210, %v210
          %v227 = vmul.f32 %v211, %v211
          %v228 = vmul.f32 %v212, %v212
          %v229 = vmul.f32 %v213, %v213
          %v230 = vmul.f32 %v214, %v214
          %v231 = vmul.f32 %v215, %v215
          %v232 = vmul.f32 %v216, %v216
          %v233 = vmul.f32 %v217, %v217
          %v234 = vmul.f32 %v218, %v218
          %v235 = vmul.f32 %v219, %v219
          %v236 = vmul.f32 %v220, %v220
          %vm237 = vcmask 523264
          %v238 = vsel %vm237, %v221, 0.0
          %239 = vadd.xlane.f32.xlu0 %v238
          %v240 = vpop.xlane.xlu0 %239
          %v241 = vsel %vm237, %v222, 0.0
          %242 = vadd.xlane.f32.xlu0 %v241
          %v243 = vpop.xlane.xlu0 %242
          %v244 = vsel %vm237, %v223, 0.0
          %245 = vadd.xlane.f32.xlu0 %v244
          %v246 = vpop.xlane.xlu0 %245
          %v247 = vsel %vm237, %v224, 0.0
          %248 = vadd.xlane.f32.xlu0 %v247
          %v249 = vpop.xlane.xlu0 %248
          %v250 = vsel %vm237, %v225, 0.0
          %251 = vadd.xlane.f32.xlu0 %v250
          %v252 = vpop.xlane.xlu0 %251
          %v253 = vsel %vm237, %v226, 0.0
          %254 = vadd.xlane.f32.xlu0 %v253
          %v255 = vpop.xlane.xlu0 %254
          %v256 = vsel %vm237, %v227, 0.0
          %257 = vadd.xlane.f32.xlu0 %v256
          %v258 = vpop.xlane.xlu0 %257
          %v259 = vsel %vm237, %v228, 0.0
          %260 = vadd.xlane.f32.xlu0 %v259
          %v261 = vpop.xlane.xlu0 %260
          %v262 = vsel %vm237, %v229, 0.0
          %263 = vadd.xlane.f32.xlu0 %v262
          %v264 = vpop.xlane.xlu0 %263
          %v265 = vsel %vm237, %v230, 0.0
          %266 = vadd.xlane.f32.xlu0 %v265
          %v267 = vpop.xlane.xlu0 %266
          %v268 = vsel %vm237, %v231, 0.0
          %269 = vadd.xlane.f32.xlu0 %v268
          %v270 = vpop.xlane.xlu0 %269
          %v271 = vsel %vm237, %v232, 0.0
          %272 = vadd.xlane.f32.xlu0 %v271
          %v273 = vpop.xlane.xlu0 %272
          %v274 = vsel %vm237, %v233, 0.0
          %275 = vadd.xlane.f32.xlu0 %v274
          %v276 = vpop.xlane.xlu0 %275
          %v277 = vsel %vm237, %v234, 0.0
          %278 = vadd.xlane.f32.xlu0 %v277
          %v279 = vpop.xlane.xlu0 %278
          %v280 = vsel %vm237, %v235, 0.0
          %281 = vadd.xlane.f32.xlu0 %v280
          %v282 = vpop.xlane.xlu0 %281
          %v283 = vsel %vm237, %v236, 0.0
          %284 = vadd.xlane.f32.xlu0 %v283
          %v285 = vpop.xlane.xlu0 %284
          %v286 = vmax.f32 %v240, 1e-24
          %v287 = vmax.f32 %v243, 1e-24
          %v288 = vmax.f32 %v246, 1e-24
          %v289 = vmax.f32 %v249, 1e-24
          %v290 = vmax.f32 %v252, 1e-24
          %v291 = vmax.f32 %v255, 1e-24
          %v292 = vmax.f32 %v258, 1e-24
          %v293 = vmax.f32 %v261, 1e-24
          %v294 = vmax.f32 %v264, 1e-24
          %v295 = vmax.f32 %v267, 1e-24
          %v296 = vmax.f32 %v270, 1e-24
          %v297 = vmax.f32 %v273, 1e-24
          %v298 = vmax.f32 %v276, 1e-24
          %v299 = vmax.f32 %v279, 1e-24
          %v300 = vmax.f32 %v282, 1e-24
          %v301 = vmax.f32 %v285, 1e-24
          %v302 = vrsqrt.pop %v286
          %v303 = vrsqrt.pop %v287
          %v304 = vrsqrt.pop %v288
          %v305 = vrsqrt.pop %v289
          %v306 = vrsqrt.pop %v290
          %v307 = vrsqrt.pop %v291
          %v308 = vrsqrt.pop %v292
          %v309 = vrsqrt.pop %v293
          %v310 = vrsqrt.pop %v294
          %v311 = vrsqrt.pop %v295
          %v312 = vrsqrt.pop %v296
          %v313 = vrsqrt.pop %v297
          %v314 = vrsqrt.pop %v298
          %v315 = vrsqrt.pop %v299
          %v316 = vrsqrt.pop %v300
          %v317 = vrsqrt.pop %v301
          %v318 = vmul.f32 %v205, %v302
          %v319 = vmul.f32 %v206, %v303
          %v320 = vmul.f32 %v207, %v304
          %v321 = vmul.f32 %v208, %v305
          %v322 = vmul.f32 %v209, %v306
          %v323 = vmul.f32 %v210, %v307
          %v324 = vmul.f32 %v211, %v308
          %v325 = vmul.f32 %v212, %v309
          %v326 = vmul.f32 %v213, %v310
          %v327 = vmul.f32 %v214, %v311
          %v328 = vmul.f32 %v215, %v312
          %v329 = vmul.f32 %v216, %v313
          %v330 = vmul.f32 %v217, %v314
          %v331 = vmul.f32 %v218, %v315
          %v332 = vmul.f32 %v219, %v316
          %v333 = vmul.f32 %v220, %v317
          %334 = vst.msk [vmem:[#allocation2] sm:$0xff] %vm237, %v318
          %335 = vst.msk [vmem:[#allocation2 + $0x8] sm:$0xff] %vm237, %v319
          %336 = vst.msk [vmem:[#allocation2 + $0x10] sm:$0xff] %vm237, %v320
          %337 = vst.msk [vmem:[#allocation2 + $0x18] sm:$0xff] %vm237, %v321
          %338 = vst.msk [vmem:[#allocation2 + $0x20] sm:$0xff] %vm237, %v322
          %339 = vst.msk [vmem:[#allocation2 + $0x28] sm:$0xff] %vm237, %v323
          %340 = vst.msk [vmem:[#allocation2 + $0x30] sm:$0xff] %vm237, %v324
          %341 = vst.msk [vmem:[#allocation2 + $0x38] sm:$0xff] %vm237, %v325
          %342 = vst.msk [vmem:[#allocation2 + $0x40] sm:$0xff] %vm237, %v326
          %343 = vst.msk [vmem:[#allocation2 + $0x48] sm:$0xff] %vm237, %v327
          %344 = vst.msk [vmem:[#allocation2 + $0x50] sm:$0xff] %vm237, %v328
          %345 = vst.msk [vmem:[#allocation2 + $0x58] sm:$0xff] %vm237, %v329
          %346 = vst.msk [vmem:[#allocation2 + $0x60] sm:$0xff] %vm237, %v330
          %347 = vst.msk [vmem:[#allocation2 + $0x68] sm:$0xff] %vm237, %v331
          %348 = vst.msk [vmem:[#allocation2 + $0x70] sm:$0xff] %vm237, %v332
          %349 = vst.msk [vmem:[#allocation2 + $0x78] sm:$0xff] %vm237, %v333
        $region36: #{tpu_custom_call.1} parent=27 // pred_fallthru
          _
        %v350 = vld [vmem:[%s166] sm:$0xff]
        %v351 = vld [vmem:[%s166 + $0x8] sm:$0xff]
        %v352 = vld [vmem:[%s166 + $0x10] sm:$0xff]
        %v353 = vld [vmem:[%s166 + $0x18] sm:$0xff]
        %v354 = vld [vmem:[%s166 + $0x20] sm:$0xff]
        %v355 = vld [vmem:[%s166 + $0x28] sm:$0xff]
        %v356 = vld [vmem:[%s166 + $0x30] sm:$0xff]
        %v357 = vld [vmem:[%s166 + $0x38] sm:$0xff]
        %v358 = vld [vmem:[%s166 + $0x40] sm:$0xff]
        %v359 = vld [vmem:[%s166 + $0x48] sm:$0xff]
        %v360 = vld [vmem:[%s166 + $0x50] sm:$0xff]
        %v361 = vld [vmem:[%s166 + $0x58] sm:$0xff]
        %v362 = vld [vmem:[%s166 + $0x60] sm:$0xff]
        %v363 = vld [vmem:[%s166 + $0x68] sm:$0xff]
        %v364 = vld [vmem:[%s166 + $0x70] sm:$0xff]
        %v365 = vld [vmem:[%s166 + $0x78] sm:$0xff]
        %v366 = vld [vmem:[%s166 + $0x80] sm:$0xff]
        %v367 = vld [vmem:[%s166 + $0x88] sm:$0xff]
        %v368 = vld [vmem:[%s166 + $0x90] sm:$0xff]
        %v369 = vld [vmem:[%s166 + $0x98] sm:$0xff]
        %v370 = vld [vmem:[%s166 + $0xa0] sm:$0xff]
        %v371 = vld [vmem:[%s166 + $0xa8] sm:$0xff]
        %v372 = vld [vmem:[%s166 + $0xb0] sm:$0xff]
        %v373 = vld [vmem:[%s166 + $0xb8] sm:$0xff]
        %v374 = vld [vmem:[%s166 + $0xc0] sm:$0xff]
        %v375 = vld [vmem:[%s166 + $0xc8] sm:$0xff]
        %v376 = vld [vmem:[%s166 + $0xd0] sm:$0xff]
        %v377 = vld [vmem:[%s166 + $0xd8] sm:$0xff]
        %v378 = vld [vmem:[%s166 + $0xe0] sm:$0xff]
        %v379 = vld [vmem:[%s166 + $0xe8] sm:$0xff]
        %v380 = vld [vmem:[%s166 + $0xf0] sm:$0xff]
        %v381 = vld [vmem:[%s166 + $0xf8] sm:$0xff]
        %v382 = vmul.f32 %v350, %v350
        %v383 = vmul.f32 %v351, %v351
        %v384 = vmul.f32 %v352, %v352
        %v385 = vmul.f32 %v353, %v353
        %v386 = vmul.f32 %v354, %v354
        %v387 = vmul.f32 %v355, %v355
        %v388 = vmul.f32 %v356, %v356
        %v389 = vmul.f32 %v357, %v357
        %v390 = vmul.f32 %v358, %v358
        %v391 = vmul.f32 %v359, %v359
        %v392 = vmul.f32 %v360, %v360
        %v393 = vmul.f32 %v361, %v361
        %v394 = vmul.f32 %v362, %v362
        %v395 = vmul.f32 %v363, %v363
        %v396 = vmul.f32 %v364, %v364
        %v397 = vmul.f32 %v365, %v365
        %v398 = vmul.f32 %v366, %v366
        %v399 = vmul.f32 %v367, %v367
        %v400 = vmul.f32 %v368, %v368
        %v401 = vmul.f32 %v369, %v369
        %v402 = vmul.f32 %v370, %v370
        %v403 = vmul.f32 %v371, %v371
        %v404 = vmul.f32 %v372, %v372
        %v405 = vmul.f32 %v373, %v373
        %v406 = vmul.f32 %v374, %v374
        %v407 = vmul.f32 %v375, %v375
        %v408 = vmul.f32 %v376, %v376
        %v409 = vmul.f32 %v377, %v377
        %v410 = vmul.f32 %v378, %v378
        %v411 = vmul.f32 %v379, %v379
        %v412 = vmul.f32 %v380, %v380
        %v413 = vmul.f32 %v381, %v381
        %v414 = vadd.f32 %v382, %v386
        %v415 = vadd.f32 %v414, %v390
        %v416 = vadd.f32 %v415, %v394
        %v417 = vadd.f32 %v416, %v398
        %v418 = vadd.f32 %v417, %v402
        %v419 = vadd.f32 %v418, %v406
        %v420 = vadd.f32 %v419, %v410
        %v421 = vrot.slane %v420, 4
        %v422 = vadd.f32 %v420, %v421
        %v423 = vrot.slane %v422, 2
        %v424 = vadd.f32 %v422, %v423
        %v425 = vrot.slane %v424, 1
        %v426 = vadd.f32 %v424, %v425
        %v427 = vadd.f32 %v383, %v387
        %v428 = vadd.f32 %v427, %v391
        %v429 = vadd.f32 %v428, %v395
        %v430 = vadd.f32 %v429, %v399
        %v431 = vadd.f32 %v430, %v403
        %v432 = vadd.f32 %v431, %v407
        %v433 = vadd.f32 %v432, %v411
        %v434 = vrot.slane %v433, 4
        %v435 = vadd.f32 %v433, %v434
        %v436 = vrot.slane %v435, 2
        %v437 = vadd.f32 %v435, %v436
        %v438 = vrot.slane %v437, 1
        %v439 = vadd.f32 %v437, %v438
        %v440 = vadd.f32 %v384, %v388
        %v441 = vadd.f32 %v440, %v392
        %v442 = vadd.f32 %v441, %v396
        %v443 = vadd.f32 %v442, %v400
        %v444 = vadd.f32 %v443, %v404
        %v445 = vadd.f32 %v444, %v408
        %v446 = vadd.f32 %v445, %v412
        %v447 = vrot.slane %v446, 4
        %v448 = vadd.f32 %v446, %v447
        %v449 = vrot.slane %v448, 2
        %v450 = vadd.f32 %v448, %v449
        %v451 = vrot.slane %v450, 1
        %v452 = vadd.f32 %v450, %v451
        %v453 = vadd.f32 %v385, %v389
        %v454 = vadd.f32 %v453, %v393
        %v455 = vadd.f32 %v454, %v397
        %v456 = vadd.f32 %v455, %v401
        %v457 = vadd.f32 %v456, %v405
        %v458 = vadd.f32 %v457, %v409
        %v459 = vadd.f32 %v458, %v413
        %v460 = vrot.slane %v459, 4
        %v461 = vadd.f32 %v459, %v460
        %v462 = vrot.slane %v461, 2
        %v463 = vadd.f32 %v461, %v462
        %v464 = vrot.slane %v463, 1
        %v465 = vadd.f32 %v463, %v464
        %v466 = vmax.f32 %v426, 1e-24
        %v467 = vmax.f32 %v439, 1e-24
        %v468 = vmax.f32 %v452, 1e-24
        %v469 = vmax.f32 %v465, 1e-24
        %v470 = vrsqrt.pop %v466
        %v471 = vrsqrt.pop %v467
        %v472 = vrsqrt.pop %v468
        %v473 = vrsqrt.pop %v469
        %v474 = vld [vmem:[#allocation2] sm:$0xff]
        %v475 = vld [vmem:[#allocation2 + $0x8] sm:$0xff]
        %v476 = vld [vmem:[#allocation2 + $0x10] sm:$0xff]
        %v477 = vld [vmem:[#allocation2 + $0x18] sm:$0xff]
        %v478 = vld [vmem:[#allocation2 + $0x20] sm:$0xff]
        %v479 = vld [vmem:[#allocation2 + $0x28] sm:$0xff]
        %v480 = vld [vmem:[#allocation2 + $0x30] sm:$0xff]
        %v481 = vld [vmem:[#allocation2 + $0x38] sm:$0xff]
        %v482 = vld [vmem:[#allocation2 + $0x40] sm:$0xff]
        %v483 = vld [vmem:[#allocation2 + $0x48] sm:$0xff]
        %v484 = vld [vmem:[#allocation2 + $0x50] sm:$0xff]
        %v485 = vld [vmem:[#allocation2 + $0x58] sm:$0xff]
        %v486 = vld [vmem:[#allocation2 + $0x60] sm:$0xff]
        %v487 = vld [vmem:[#allocation2 + $0x68] sm:$0xff]
        %v488 = vld [vmem:[#allocation2 + $0x70] sm:$0xff]
        %v489 = vld [vmem:[#allocation2 + $0x78] sm:$0xff]
        %v490 = vmul.f32 %v350, %v470
        %v491 = vmul.f32 %v351, %v471
        %v492 = vmul.f32 %v352, %v472
        %v493 = vmul.f32 %v353, %v473
        %v494 = vmul.f32 %v354, %v470
        %v495 = vmul.f32 %v355, %v471
        %v496 = vmul.f32 %v356, %v472
        %v497 = vmul.f32 %v357, %v473
        %v498 = vmul.f32 %v358, %v470
        %v499 = vmul.f32 %v359, %v471
        %v500 = vmul.f32 %v360, %v472
        %v501 = vmul.f32 %v361, %v473
        %v502 = vmul.f32 %v362, %v470
        %v503 = vmul.f32 %v363, %v471
        %v504 = vmul.f32 %v364, %v472
        %v505 = vmul.f32 %v365, %v473
        %v506 = vmul.f32 %v366, %v470
        %v507 = vmul.f32 %v367, %v471
        %v508 = vmul.f32 %v368, %v472
        %v509 = vmul.f32 %v369, %v473
        %v510 = vmul.f32 %v370, %v470
        %v511 = vmul.f32 %v371, %v471
        %v512 = vmul.f32 %v372, %v472
        %v513 = vmul.f32 %v373, %v473
        %v514 = vmul.f32 %v374, %v470
        %v515 = vmul.f32 %v375, %v471
        %v516 = vmul.f32 %v376, %v472
        %v517 = vmul.f32 %v377, %v473
        %v518 = vmul.f32 %v378, %v470
        %v519 = vmul.f32 %v379, %v471
        %v520 = vmul.f32 %v380, %v472
        %v521 = vmul.f32 %v381, %v473
        %vm522 = vcmask 523264
        %v524 = vsel %vm522, %v474, 0
        %v527 = vsel %vm522, %v475, 0
        %v530 = vsel %vm522, %v476, 0
        %v533 = vsel %vm522, %v477, 0
        %v536 = vsel %vm522, %v478, 0
        %v539 = vsel %vm522, %v479, 0
        %v542 = vsel %vm522, %v480, 0
        %v545 = vsel %vm522, %v481, 0
        %v548 = vsel %vm522, %v482, 0
        %v551 = vsel %vm522, %v483, 0
        %v554 = vsel %vm522, %v484, 0
        %v557 = vsel %vm522, %v485, 0
        %v560 = vsel %vm522, %v486, 0
        %v563 = vsel %vm522, %v487, 0
        %v566 = vsel %vm522, %v488, 0
        %v569 = vsel %vm522, %v489, 0
        %571 = vmatprep.subr.mxu0 %v491
        %572 = vmatpush1.msra.mxu0 %v490
        %573 = vmatprep.subr.mxu0 %v495
        %574 = vmatpush1.msra.mxu0 %v494
        %575 = vmatprep.subr.mxu0 %v499
        %576 = vmatpush1.msra.mxu0 %v498
        %577 = vmatprep.subr.mxu0 %v503
        %578 = vmatpush1.msra.mxu0 %v502
        %579 = vmatprep.subr.mxu0 %v507
        %580 = vmatpush1.msra.mxu0 %v506
        %581 = vmatprep.subr.mxu0 %v511
        %582 = vmatpush1.msra.mxu0 %v510
        %583 = vmatprep.subr.mxu0 %v515
        %584 = vmatpush1.msra.mxu0 %v514
        %585 = vmatprep.subr.mxu0 %v519
        %586 = vmatpush1.msra.mxu0 %v518
        %587 = vmatprep.subr.mxu0 0.0
        %588 = vmatpush1.msra.mxu0 0.0
        %589 = vmatprep.subr.mxu0 0.0
        %590 = vmatpush1.msra.mxu0 0.0
        %591 = vmatprep.subr.mxu0 0.0
        %592 = vmatpush1.msra.mxu0 0.0
        %593 = vmatprep.subr.mxu0 0.0
        %594 = vmatpush1.msra.mxu0 0.0
        %595 = vmatprep.subr.mxu0 0.0
        %596 = vmatpush1.msra.mxu0 0.0
        %597 = vmatprep.subr.mxu0 0.0
        %598 = vmatpush1.msra.mxu0 0.0
        %599 = vmatprep.subr.mxu0 0.0
        %600 = vmatpush1.msra.mxu0 0.0
        %601 = vmatprep.subr.mxu0 0.0
        %602 = vmatpush1.msra.mxu0 0.0
        %603 = vmatprep.subr.mxu0 0.0
        %604 = vmatpush1.msra.mxu0 0.0
        %605 = vmatprep.subr.mxu0 0.0
        %606 = vmatpush1.msra.mxu0 0.0
        %607 = vmatprep.subr.mxu0 0.0
        %608 = vmatpush1.msra.mxu0 0.0
        %609 = vmatprep.subr.mxu0 0.0
        %610 = vmatpush1.msra.mxu0 0.0
        %611 = vmatprep.subr.mxu0 0.0
        %612 = vmatpush1.msra.mxu0 0.0
        %613 = vmatprep.subr.mxu0 0.0
        %614 = vmatpush1.msra.mxu0 0.0
        %615 = vmatprep.subr.mxu0 0.0
        %616 = vmatpush1.msra.mxu0 0.0
        %617 = vmatprep.subr.mxu0 0.0
        %618 = vmatpush1.msra.mxu0 0.0
        %619 = vmatprep.subr.mxu0 0.0
        %620 = vmatpush1.msra.mxu0 0.0
        %621 = vmatprep.subr.mxu0 0.0
        %622 = vmatpush1.msra.mxu0 0.0
        %623 = vmatprep.subr.mxu0 0.0
        %624 = vmatpush1.msra.mxu0 0.0
        %625 = vmatprep.subr.mxu0 0.0
        %626 = vmatpush1.msra.mxu0 0.0
        %627 = vmatprep.subr.mxu0 0.0
        %628 = vmatpush1.msra.mxu0 0.0
        %629 = vmatprep.subr.mxu0 0.0
        %630 = vmatpush1.msra.mxu0 0.0
        %631 = vmatprep.subr.mxu0 0.0
        %632 = vmatpush1.msra.mxu0 0.0
        %633 = vmatprep.subr.mxu0 0.0
        %634 = vmatpush1.msra.mxu0 0.0
        %635 = vmatprep.mubr.f32.mxu0 0.0
        %636 = vmatmul.mubr.f32.gmra.mrb[0].mxu0 %v524
        %v637 = vpop.f32.mrb[0].mxu0
        %v638 = vadd.f32 0.0, %v637
        %v639 = vpop.f32.mrb[0].mxu0
        %v640 = vadd.f32 0.0, %v639
        %641 = vmatprep.mubr.f32.mxu0 0.0
        %642 = vmatmul.mubr.f32.gmra.mrb[0].mxu0 %v527
        %v643 = vpop.f32.mrb[0].mxu0
        %v644 = vadd.f32 0.0, %v643
        %v645 = vpop.f32.mrb[0].mxu0
        %v646 = vadd.f32 0.0, %v645
        %647 = vmatprep.mubr.f32.mxu0 0.0
        %648 = vmatmul.mubr.f32.gmra.mrb[0].mxu0 %v530
        %v649 = vpop.f32.mrb[0].mxu0
        %v650 = vadd.f32 0.0, %v649
        %v651 = vpop.f32.mrb[0].mxu0
        %v652 = vadd.f32 0.0, %v651
        %653 = vmatprep.mubr.f32.mxu0 0.0
        %654 = vmatmul.mubr.f32.gmra.mrb[0].mxu0 %v533
        %v655 = vpop.f32.mrb[0].mxu0
        %v656 = vadd.f32 0.0, %v655
        %v657 = vpop.f32.mrb[0].mxu0
        %v658 = vadd.f32 0.0, %v657
        %659 = vmatprep.mubr.f32.mxu0 0.0
        %660 = vmatmul.mubr.f32.gmra.mrb[0].mxu0 %v536
        %v661 = vpop.f32.mrb[0].mxu0
        %v662 = vadd.f32 0.0, %v661
        %v663 = vpop.f32.mrb[0].mxu0
        %v664 = vadd.f32 0.0, %v663
        %665 = vmatprep.mubr.f32.mxu0 0.0
        %666 = vmatmul.mubr.f32.gmra.mrb[0].mxu0 %v539
        %v667 = vpop.f32.mrb[0].mxu0
        %v668 = vadd.f32 0.0, %v667
        %v669 = vpop.f32.mrb[0].mxu0
        %v670 = vadd.f32 0.0, %v669
        %671 = vmatprep.mubr.f32.mxu0 0.0
        %672 = vmatmul.mubr.f32.gmra.mrb[0].mxu0 %v542
        %v673 = vpop.f32.mrb[0].mxu0
        %v674 = vadd.f32 0.0, %v673
        %v675 = vpop.f32.mrb[0].mxu0
        %v676 = vadd.f32 0.0, %v675
        %677 = vmatprep.mubr.f32.mxu0 0.0
        %678 = vmatmul.mubr.f32.gmra.mrb[0].mxu0 %v545
        %v679 = vpop.f32.mrb[0].mxu0
        %v680 = vadd.f32 0.0, %v679
        %v681 = vpop.f32.mrb[0].mxu0
        %v682 = vadd.f32 0.0, %v681
        %683 = vmatprep.mubr.f32.mxu0 0.0
        %684 = vmatmul.mubr.f32.gmra.mrb[0].mxu0 %v548
        %v685 = vpop.f32.mrb[0].mxu0
        %v686 = vadd.f32 0.0, %v685
        %v687 = vpop.f32.mrb[0].mxu0
        %v688 = vadd.f32 0.0, %v687
        %689 = vmatprep.mubr.f32.mxu0 0.0
        %690 = vmatmul.mubr.f32.gmra.mrb[0].mxu0 %v551
        %v691 = vpop.f32.mrb[0].mxu0
        %v692 = vadd.f32 0.0, %v691
        %v693 = vpop.f32.mrb[0].mxu0
        %v694 = vadd.f32 0.0, %v693
        %695 = vmatprep.mubr.f32.mxu0 0.0
        %696 = vmatmul.mubr.f32.gmra.mrb[0].mxu0 %v554
        %v697 = vpop.f32.mrb[0].mxu0
        %v698 = vadd.f32 0.0, %v697
        %v699 = vpop.f32.mrb[0].mxu0
        %v700 = vadd.f32 0.0, %v699
        %701 = vmatprep.mubr.f32.mxu0 0.0
        %702 = vmatmul.mubr.f32.gmra.mrb[0].mxu0 %v557
        %v703 = vpop.f32.mrb[0].mxu0
        %v704 = vadd.f32 0.0, %v703
        %v705 = vpop.f32.mrb[0].mxu0
        %v706 = vadd.f32 0.0, %v705
        %707 = vmatprep.mubr.f32.mxu0 0.0
        %708 = vmatmul.mubr.f32.gmra.mrb[0].mxu0 %v560
        %v709 = vpop.f32.mrb[0].mxu0
        %v710 = vadd.f32 0.0, %v709
        %v711 = vpop.f32.mrb[0].mxu0
        %v712 = vadd.f32 0.0, %v711
        %713 = vmatprep.mubr.f32.mxu0 0.0
        %714 = vmatmul.mubr.f32.gmra.mrb[0].mxu0 %v563
        %v715 = vpop.f32.mrb[0].mxu0
        %v716 = vadd.f32 0.0, %v715
        %v717 = vpop.f32.mrb[0].mxu0
        %v718 = vadd.f32 0.0, %v717
        %719 = vmatprep.mubr.f32.mxu0 0.0
        %720 = vmatmul.mubr.f32.gmra.mrb[0].mxu0 %v566
        %v721 = vpop.f32.mrb[0].mxu0
        %v722 = vadd.f32 0.0, %v721
        %v723 = vpop.f32.mrb[0].mxu0
        %v724 = vadd.f32 0.0, %v723
        %725 = vmatprep.mubr.f32.mxu0 0.0
        %726 = vmatmul.mubr.f32.gmra.mrb[0].mxu0 %v569
        %v727 = vpop.f32.mrb[0].mxu0
        %v728 = vadd.f32 0.0, %v727
        %v729 = vpop.f32.mrb[0].mxu0
        %v730 = vadd.f32 0.0, %v729
        %731 = vdwg.mxu0
        %732 = vmatprep.subr.mxu0 %v493
        %733 = vmatpush1.msra.mxu0 %v492
        %734 = vmatprep.subr.mxu0 %v497
        %735 = vmatpush1.msra.mxu0 %v496
        %736 = vmatprep.subr.mxu0 %v501
        %737 = vmatpush1.msra.mxu0 %v500
        %738 = vmatprep.subr.mxu0 %v505
        %739 = vmatpush1.msra.mxu0 %v504
        %740 = vmatprep.subr.mxu0 %v509
        %741 = vmatpush1.msra.mxu0 %v508
        %742 = vmatprep.subr.mxu0 %v513
        %743 = vmatpush1.msra.mxu0 %v512
        %744 = vmatprep.subr.mxu0 %v517
        %745 = vmatpush1.msra.mxu0 %v516
        %746 = vmatprep.subr.mxu0 %v521
        %747 = vmatpush1.msra.mxu0 %v520
        %748 = vmatprep.subr.mxu0 0.0
        %749 = vmatpush1.msra.mxu0 0.0
        %750 = vmatprep.subr.mxu0 0.0
        %751 = vmatpush1.msra.mxu0 0.0
        %752 = vmatprep.subr.mxu0 0.0
        %753 = vmatpush1.msra.mxu0 0.0
        %754 = vmatprep.subr.mxu0 0.0
        %755 = vmatpush1.msra.mxu0 0.0
        %756 = vmatprep.subr.mxu0 0.0
        %757 = vmatpush1.msra.mxu0 0.0
        %758 = vmatprep.subr.mxu0 0.0
        %759 = vmatpush1.msra.mxu0 0.0
        %760 = vmatprep.subr.mxu0 0.0
        %761 = vmatpush1.msra.mxu0 0.0
        %762 = vmatprep.subr.mxu0 0.0
        %763 = vmatpush1.msra.mxu0 0.0
        %764 = vmatprep.subr.mxu0 0.0
        %765 = vmatpush1.msra.mxu0 0.0
        %766 = vmatprep.subr.mxu0 0.0
        %767 = vmatpush1.msra.mxu0 0.0
        %768 = vmatprep.subr.mxu0 0.0
        %769 = vmatpush1.msra.mxu0 0.0
        %770 = vmatprep.subr.mxu0 0.0
        %771 = vmatpush1.msra.mxu0 0.0
        %772 = vmatprep.subr.mxu0 0.0
        %773 = vmatpush1.msra.mxu0 0.0
        %774 = vmatprep.subr.mxu0 0.0
        %775 = vmatpush1.msra.mxu0 0.0
        %776 = vmatprep.subr.mxu0 0.0
        %777 = vmatpush1.msra.mxu0 0.0
        %778 = vmatprep.subr.mxu0 0.0
        %779 = vmatpush1.msra.mxu0 0.0
        %780 = vmatprep.subr.mxu0 0.0
        %781 = vmatpush1.msra.mxu0 0.0
        %782 = vmatprep.subr.mxu0 0.0
        %783 = vmatpush1.msra.mxu0 0.0
        %784 = vmatprep.subr.mxu0 0.0
        %785 = vmatpush1.msra.mxu0 0.0
        %786 = vmatprep.subr.mxu0 0.0
        %787 = vmatpush1.msra.mxu0 0.0
        %788 = vmatprep.subr.mxu0 0.0
        %789 = vmatpush1.msra.mxu0 0.0
        %790 = vmatprep.subr.mxu0 0.0
        %791 = vmatpush1.msra.mxu0 0.0
        %792 = vmatprep.subr.mxu0 0.0
        %793 = vmatpush1.msra.mxu0 0.0
        %794 = vmatprep.subr.mxu0 0.0
        %795 = vmatpush1.msra.mxu0 0.0
        %796 = vmatprep.mubr.f32.mxu0 0.0
        %797 = vmatmul.mubr.f32.gmra.mrb[0].mxu0 %v524
        %v798 = vpop.f32.mrb[0].mxu0
        %v799 = vadd.f32 0.0, %v798
        %v800 = vpop.f32.mrb[0].mxu0
        %v801 = vadd.f32 0.0, %v800
        %802 = vmatprep.mubr.f32.mxu0 0.0
        %803 = vmatmul.mubr.f32.gmra.mrb[0].mxu0 %v527
        %v804 = vpop.f32.mrb[0].mxu0
        %v805 = vadd.f32 0.0, %v804
        %v806 = vpop.f32.mrb[0].mxu0
        %v807 = vadd.f32 0.0, %v806
        %808 = vmatprep.mubr.f32.mxu0 0.0
        %809 = vmatmul.mubr.f32.gmra.mrb[0].mxu0 %v530
        %v810 = vpop.f32.mrb[0].mxu0
        %v811 = vadd.f32 0.0, %v810
        %v812 = vpop.f32.mrb[0].mxu0
        %v813 = vadd.f32 0.0, %v812
        %814 = vmatprep.mubr.f32.mxu0 0.0
        %815 = vmatmul.mubr.f32.gmra.mrb[0].mxu0 %v533
        %v816 = vpop.f32.mrb[0].mxu0
        %v817 = vadd.f32 0.0, %v816
        %v818 = vpop.f32.mrb[0].mxu0
        %v819 = vadd.f32 0.0, %v818
        %820 = vmatprep.mubr.f32.mxu0 0.0
        %821 = vmatmul.mubr.f32.gmra.mrb[0].mxu0 %v536
        %v822 = vpop.f32.mrb[0].mxu0
        %v823 = vadd.f32 0.0, %v822
        %v824 = vpop.f32.mrb[0].mxu0
        %v825 = vadd.f32 0.0, %v824
        %826 = vmatprep.mubr.f32.mxu0 0.0
        %827 = vmatmul.mubr.f32.gmra.mrb[0].mxu0 %v539
        %v828 = vpop.f32.mrb[0].mxu0
        %v829 = vadd.f32 0.0, %v828
        %v830 = vpop.f32.mrb[0].mxu0
        %v831 = vadd.f32 0.0, %v830
        %832 = vmatprep.mubr.f32.mxu0 0.0
        %833 = vmatmul.mubr.f32.gmra.mrb[0].mxu0 %v542
        %v834 = vpop.f32.mrb[0].mxu0
        %v835 = vadd.f32 0.0, %v834
        %v836 = vpop.f32.mrb[0].mxu0
        %v837 = vadd.f32 0.0, %v836
        %838 = vmatprep.mubr.f32.mxu0 0.0
        %839 = vmatmul.mubr.f32.gmra.mrb[0].mxu0 %v545
        %v840 = vpop.f32.mrb[0].mxu0
        %v841 = vadd.f32 0.0, %v840
        %v842 = vpop.f32.mrb[0].mxu0
        %v843 = vadd.f32 0.0, %v842
        %844 = vmatprep.mubr.f32.mxu0 0.0
        %845 = vmatmul.mubr.f32.gmra.mrb[0].mxu0 %v548
        %v846 = vpop.f32.mrb[0].mxu0
        %v847 = vadd.f32 0.0, %v846
        %v848 = vpop.f32.mrb[0].mxu0
        %v849 = vadd.f32 0.0, %v848
        %850 = vmatprep.mubr.f32.mxu0 0.0
        %851 = vmatmul.mubr.f32.gmra.mrb[0].mxu0 %v551
        %v852 = vpop.f32.mrb[0].mxu0
        %v853 = vadd.f32 0.0, %v852
        %v854 = vpop.f32.mrb[0].mxu0
        %v855 = vadd.f32 0.0, %v854
        %856 = vmatprep.mubr.f32.mxu0 0.0
        %857 = vmatmul.mubr.f32.gmra.mrb[0].mxu0 %v554
        %v858 = vpop.f32.mrb[0].mxu0
        %v859 = vadd.f32 0.0, %v858
        %v860 = vpop.f32.mrb[0].mxu0
        %v861 = vadd.f32 0.0, %v860
        %862 = vmatprep.mubr.f32.mxu0 0.0
        %863 = vmatmul.mubr.f32.gmra.mrb[0].mxu0 %v557
        %v864 = vpop.f32.mrb[0].mxu0
        %v865 = vadd.f32 0.0, %v864
        %v866 = vpop.f32.mrb[0].mxu0
        %v867 = vadd.f32 0.0, %v866
        %868 = vmatprep.mubr.f32.mxu0 0.0
        %869 = vmatmul.mubr.f32.gmra.mrb[0].mxu0 %v560
        %v870 = vpop.f32.mrb[0].mxu0
        %v871 = vadd.f32 0.0, %v870
        %v872 = vpop.f32.mrb[0].mxu0
        %v873 = vadd.f32 0.0, %v872
        %874 = vmatprep.mubr.f32.mxu0 0.0
        %875 = vmatmul.mubr.f32.gmra.mrb[0].mxu0 %v563
        %v876 = vpop.f32.mrb[0].mxu0
        %v877 = vadd.f32 0.0, %v876
        %v878 = vpop.f32.mrb[0].mxu0
        %v879 = vadd.f32 0.0, %v878
        %880 = vmatprep.mubr.f32.mxu0 0.0
        %881 = vmatmul.mubr.f32.gmra.mrb[0].mxu0 %v566
        %v882 = vpop.f32.mrb[0].mxu0
        %v883 = vadd.f32 0.0, %v882
        %v884 = vpop.f32.mrb[0].mxu0
        %v885 = vadd.f32 0.0, %v884
        %886 = vmatprep.mubr.f32.mxu0 0.0
        %887 = vmatmul.mubr.f32.gmra.mrb[0].mxu0 %v569
        %v888 = vpop.f32.mrb[0].mxu0
        %v889 = vadd.f32 0.0, %v888
        %v890 = vpop.f32.mrb[0].mxu0
        %v891 = vadd.f32 0.0, %v890
        %892 = vdwg.mxu0
        %v893 = vmul.f32 %v638, 30.0
        %v894 = vmul.f32 %v640, 30.0
        %v895 = vmul.f32 %v799, 30.0
        %v896 = vmul.f32 %v801, 30.0
        %v897 = vmul.f32 %v644, 30.0
        %v898 = vmul.f32 %v646, 30.0
        %v899 = vmul.f32 %v805, 30.0
        %v900 = vmul.f32 %v807, 30.0
        %v901 = vmul.f32 %v650, 30.0
        %v902 = vmul.f32 %v652, 30.0
        %v903 = vmul.f32 %v811, 30.0
        %v904 = vmul.f32 %v813, 30.0
        %v905 = vmul.f32 %v656, 30.0
        %v906 = vmul.f32 %v658, 30.0
        %v907 = vmul.f32 %v817, 30.0
        %v908 = vmul.f32 %v819, 30.0
        %v909 = vmul.f32 %v662, 30.0
        %v910 = vmul.f32 %v664, 30.0
        %v911 = vmul.f32 %v823, 30.0
        %v912 = vmul.f32 %v825, 30.0
        %v913 = vmul.f32 %v668, 30.0
        %v914 = vmul.f32 %v670, 30.0
        %v915 = vmul.f32 %v829, 30.0
        %v916 = vmul.f32 %v831, 30.0
        %v917 = vmul.f32 %v674, 30.0
        %v918 = vmul.f32 %v676, 30.0
        %v919 = vmul.f32 %v835, 30.0
        %v920 = vmul.f32 %v837, 30.0
        %v921 = vmul.f32 %v680, 30.0
        %v922 = vmul.f32 %v682, 30.0
        %v923 = vmul.f32 %v841, 30.0
        %v924 = vmul.f32 %v843, 30.0
        %v925 = vmul.f32 %v686, 30.0
        %v926 = vmul.f32 %v688, 30.0
        %v927 = vmul.f32 %v847, 30.0
        %v928 = vmul.f32 %v849, 30.0
        %v929 = vmul.f32 %v692, 30.0
        %v930 = vmul.f32 %v694, 30.0
        %v931 = vmul.f32 %v853, 30.0
        %v932 = vmul.f32 %v855, 30.0
        %v933 = vmul.f32 %v698, 30.0
        %v934 = vmul.f32 %v700, 30.0
        %v935 = vmul.f32 %v859, 30.0
        %v936 = vmul.f32 %v861, 30.0
        %v937 = vmul.f32 %v704, 30.0
        %v938 = vmul.f32 %v706, 30.0
        %v939 = vmul.f32 %v865, 30.0
        %v940 = vmul.f32 %v867, 30.0
        %v941 = vmul.f32 %v710, 30.0
        %v942 = vmul.f32 %v712, 30.0
        %v943 = vmul.f32 %v871, 30.0
        %v944 = vmul.f32 %v873, 30.0
        %v945 = vmul.f32 %v716, 30.0
        %v946 = vmul.f32 %v718, 30.0
        %v947 = vmul.f32 %v877, 30.0
        %v948 = vmul.f32 %v879, 30.0
        %v949 = vmul.f32 %v722, 30.0
        %v950 = vmul.f32 %v724, 30.0
        %v951 = vmul.f32 %v883, 30.0
        %v952 = vmul.f32 %v885, 30.0
        %v953 = vmul.f32 %v728, 30.0
        %v954 = vmul.f32 %v730, 30.0
        %v955 = vmul.f32 %v889, 30.0
        %v956 = vmul.f32 %v891, 30.0
        %957 = vst [vmem:[%s191] sm:$0xff] %v893
        %958 = vst [vmem:[%s191 + $0x8] sm:$0xff] %v894
        %959 = vst [vmem:[%s191 + $0x10] sm:$0xff] %v895
        %960 = vst [vmem:[%s191 + $0x18] sm:$0xff] %v896
        %961 = vst [vmem:[%s191 + $0x20] sm:$0xff] %v897
        %962 = vst [vmem:[%s191 + $0x28] sm:$0xff] %v898
        %963 = vst [vmem:[%s191 + $0x30] sm:$0xff] %v899
        %964 = vst [vmem:[%s191 + $0x38] sm:$0xff] %v900
        %965 = vst [vmem:[%s191 + $0x40] sm:$0xff] %v901
        %966 = vst [vmem:[%s191 + $0x48] sm:$0xff] %v902
        %967 = vst [vmem:[%s191 + $0x50] sm:$0xff] %v903
        %968 = vst [vmem:[%s191 + $0x58] sm:$0xff] %v904
        %969 = vst [vmem:[%s191 + $0x60] sm:$0xff] %v905
        %970 = vst [vmem:[%s191 + $0x68] sm:$0xff] %v906
        %971 = vst [vmem:[%s191 + $0x70] sm:$0xff] %v907
        %972 = vst [vmem:[%s191 + $0x78] sm:$0xff] %v908
        %973 = vst [vmem:[%s191 + $0x80] sm:$0xff] %v909
        %974 = vst [vmem:[%s191 + $0x88] sm:$0xff] %v910
        %975 = vst [vmem:[%s191 + $0x90] sm:$0xff] %v911
        %976 = vst [vmem:[%s191 + $0x98] sm:$0xff] %v912
        %977 = vst [vmem:[%s191 + $0xa0] sm:$0xff] %v913
        %978 = vst [vmem:[%s191 + $0xa8] sm:$0xff] %v914
        %979 = vst [vmem:[%s191 + $0xb0] sm:$0xff] %v915
        %980 = vst [vmem:[%s191 + $0xb8] sm:$0xff] %v916
        %981 = vst [vmem:[%s191 + $0xc0] sm:$0xff] %v917
        %982 = vst [vmem:[%s191 + $0xc8] sm:$0xff] %v918
        %983 = vst [vmem:[%s191 + $0xd0] sm:$0xff] %v919
        %984 = vst [vmem:[%s191 + $0xd8] sm:$0xff] %v920
        %985 = vst [vmem:[%s191 + $0xe0] sm:$0xff] %v921
        %986 = vst [vmem:[%s191 + $0xe8] sm:$0xff] %v922
        %987 = vst [vmem:[%s191 + $0xf0] sm:$0xff] %v923
        %988 = vst [vmem:[%s191 + $0xf8] sm:$0xff] %v924
        %989 = vst [vmem:[%s191 + $0x100] sm:$0xff] %v925
        %990 = vst [vmem:[%s191 + $0x108] sm:$0xff] %v926
        %991 = vst [vmem:[%s191 + $0x110] sm:$0xff] %v927
        %992 = vst [vmem:[%s191 + $0x118] sm:$0xff] %v928
        %993 = vst [vmem:[%s191 + $0x120] sm:$0xff] %v929
        %994 = vst [vmem:[%s191 + $0x128] sm:$0xff] %v930
        %995 = vst [vmem:[%s191 + $0x130] sm:$0xff] %v931
        %996 = vst [vmem:[%s191 + $0x138] sm:$0xff] %v932
        %997 = vst [vmem:[%s191 + $0x140] sm:$0xff] %v933
        %998 = vst [vmem:[%s191 + $0x148] sm:$0xff] %v934
        %999 = vst [vmem:[%s191 + $0x150] sm:$0xff] %v935
        %1000 = vst [vmem:[%s191 + $0x158] sm:$0xff] %v936
        %1001 = vst [vmem:[%s191 + $0x160] sm:$0xff] %v937
        %1002 = vst [vmem:[%s191 + $0x168] sm:$0xff] %v938
        %1003 = vst [vmem:[%s191 + $0x170] sm:$0xff] %v939
        %1004 = vst [vmem:[%s191 + $0x178] sm:$0xff] %v940
        %1005 = vst [vmem:[%s191 + $0x180] sm:$0xff] %v941
        %1006 = vst [vmem:[%s191 + $0x188] sm:$0xff] %v942
        %1007 = vst [vmem:[%s191 + $0x190] sm:$0xff] %v943
        %1008 = vst [vmem:[%s191 + $0x198] sm:$0xff] %v944
        %1009 = vst [vmem:[%s191 + $0x1a0] sm:$0xff] %v945
        %1010 = vst [vmem:[%s191 + $0x1a8] sm:$0xff] %v946
        %1011 = vst [vmem:[%s191 + $0x1b0] sm:$0xff] %v947
        %1012 = vst [vmem:[%s191 + $0x1b8] sm:$0xff] %v948
        %1013 = vst [vmem:[%s191 + $0x1c0] sm:$0xff] %v949
        %1014 = vst [vmem:[%s191 + $0x1c8] sm:$0xff] %v950
        %1015 = vst [vmem:[%s191 + $0x1d0] sm:$0xff] %v951
        %1016 = vst [vmem:[%s191 + $0x1d8] sm:$0xff] %v952
        %1017 = vst [vmem:[%s191 + $0x1e0] sm:$0xff] %v953
        %1018 = vst [vmem:[%s191 + $0x1e8] sm:$0xff] %v954
        %1019 = vst [vmem:[%s191 + $0x1f0] sm:$0xff] %v955
        %1020 = vst [vmem:[%s191 + $0x1f8] sm:$0xff] %v956
        %s1021 = sand.u32 %s93, 1
        %s1022 = scalar_lea.sflag [#allocation5], %s1021
        %s1023 = sand.u32 %s93, 1
        %s1024 = smul.addr %s1023, 512
        %s1025 = scalar_lea.vmem [#allocation6], %s1024
        // Predicated region
        $region37: #{tpu_custom_call.1} parent=27 // pred_check
          %p1026 = pneg %p103
        $region38: #{tpu_custom_call.1} parent=27 // pred_check_branch
          %1028 = sbr.rel (%p1026) target = $region40
        $region39: #{tpu_custom_call.1} parent=27 // pred_region
          %s1029 = smul.u32 16, %s23
          %s1030 = smul.u32 4, %s24
          %s1032 = ssub.s32 8192, 8192
          %1033 = vsyncadd %s1022, %s1032
          %s1034 = smul.addr %s1029, 8
          %s1035 = sadd.s32 %s1030, %s1034
          %s1036 = smul.addr %s1035, 128
          %s1037 = scalar_lea.hbm %s2, %s1036
          %s1038 = sshll.u32 %s1025, 4
          %s1039 = int_to_ptr.vmem [resolvable:$true] %s1038
          %1044 = dma.vmem_to_hbm [thread:$0]  %s1039, 8192, %s1037, %s1022, 512, 1024, 32
        $region40: #{tpu_custom_call.1} parent=27 // pred_fallthru
          _
      $region28: #{tpu_custom_call.1} parent=5 // pred_fallthru
        _
      %p1045 = scmp.le.s32.totalorder 2, %s14
      // Predicated region
      $region41: #{tpu_custom_call.1} parent=5 // pred_check
        %p1046 = pneg %p1045
      $region42: #{tpu_custom_call.1} parent=5 // pred_check_branch
        %1048 = sbr.rel (%p1046) target = $region44
      $region43: #{tpu_custom_call.1} parent=5 // pred_region
        %s1049 = ssub.s32 %s14, 2
        // Predicated region
        $region45: #{tpu_custom_call.1} parent=43 // pred_check
          %p1050 = pneg %p109
        $region46: #{tpu_custom_call.1} parent=43 // pred_check_branch
          %1052 = sbr.rel (%p1050) target = $region48
        $region47: #{tpu_custom_call.1} parent=43 // pred_region
          %s1053 = sand.u32 %s94, 1
          %s1054 = scalar_lea.sflag [#allocation5], %s1053
          %s1055 = sand.u32 %s94, 1
          %s1056 = smul.addr %s1055, 512
          %s1057 = scalar_lea.vmem [#allocation6], %s1056
          %1058 = dma.done %s1054, 8192
        $region48: #{tpu_custom_call.1} parent=43 // pred_fallthru
          _
      $region44: #{tpu_custom_call.1} parent=5 // pred_fallthru
        _
    $region6: #{tpu_custom_call.1} parent=1 // loop_footer
      %s18 = sadd.s32 1, %s14
    $region7: #{tpu_custom_call.1} parent=1 // loop_footer_branch
      %13 = sbr.rel target = $region3
    $region8: #{tpu_custom_call.1} parent=1 // loop_exit
      _
    %1059 = vsyncpa [#allocation4], 1
    %s1060 = scalar_lea.sflag [#allocation4], 1
    %1061 = vsyncpa %s1060, 1
    %1062 = vsyncpa [#allocation5], 1
    %s1063 = scalar_lea.sflag [#allocation5], 1
    %1064 = vsyncpa %s1063, 1

</llo_original>
